<compile_context>
chip_gen: v5e
topology: v5e:2x2
jax: 0.10.0
libtpu: 0.0.40
codegen_flags: <defaults>
</compile_context>

<pallas_src>
import functools

import jax
import jax.numpy as jnp
from jax import lax
from jax.experimental import pallas as pl
from jax.experimental.pallas import tpu as pltpu

DISEASE_NAMES = [
    'Atelectasis', 'Cardiomegaly', 'Effusion', 'Infiltration', 'Mass',
    'Nodule', 'Pneumonia', 'Pneumothorax', 'Consolidation', 'Edema',
    'Emphysema', 'Fibrosis', 'Pleural_Thickening', 'Hernia'
]
NUM_DISEASES = len(DISEASE_NAMES)

DISEASE_RELATIONSHIPS = {
    ('Effusion', 'Pleural_Thickening'): 0.8,
    ('Infiltration', 'Pneumonia'): 0.7,
    ('Mass', 'Nodule'): 0.6,
    ('Edema', 'Effusion'): 0.7,
    ('Emphysema', 'Fibrosis'): 0.5,
    ('Pneumonia', 'Consolidation'): 0.8,
}

PAIRS = [(DISEASE_NAMES.index(a), DISEASE_NAMES.index(b), float(c))
         for (a, b), c in DISEASE_RELATIONSHIPS.items()]
NUM_PAIRS = len(PAIRS)


def _round_up(x, m):
    return (x + m - 1) // m * m


def _cdiv(a, b):
    return (a + b - 1) // b


def _consistency_kernel(logits_ref, feat_ref, out_ref, *, feat_dim, tile_rows,
                        tiles_per_group, batch, mask_rows):
    g = pl.program_id(0)          # core-group axis ("parallel" -> v7x 2-TC split)
    i = pl.program_id(1)          # batch-tile axis within the group ("arbitrary")

    # The output block (g, 0) stays resident in VMEM across the whole inner
    # axis, so it is used directly as the accumulator (no scratch).  Every
    # element of the block carries the same partial sum; the wrapper reads one
    # element per group and sums the partials.
    @pl.when(i == 0)
    def _init():
        out_ref[...] = jnp.zeros_like(out_ref)

    # ---- KL pieces, vectorized once over all 14 disease channels -----------
    probs = jax.nn.sigmoid(logits_ref[...].astype(jnp.float32))          # (tb, 14)
    log_p_eps = jnp.log(probs + 1e-10)                                    # log(p + 1e-10)
    p_log_p = probs * jnp.log(jnp.maximum(probs, 1e-30))                  # xlogy(p, p): 0 at p==0

    feats = feat_ref[...]                                                 # (tb, 14*D) input dtype
    D = feat_dim

    row_total = jnp.zeros((tile_rows, 1), jnp.float32)
    for i1, i2, conf in PAIRS:                                            # static unroll (6 pairs)
        # F.kl_div(log(p1 + 1e-10), p2, 'none') = p2*(log p2 - log(p1+1e-10))
        kl = p_log_p[:, i2:i2 + 1] - probs[:, i2:i2 + 1] * log_p_eps[:, i1:i1 + 1]
        # L2 feature distance; slices stay in input dtype, math in f32 (VPU+XLU, no MXU).
        fa = feats[:, i1 * D:(i1 + 1) * D].astype(jnp.float32)
        fb = feats[:, i2 * D:(i2 + 1) * D].astype(jnp.float32)
        diff = fa - fb
        dist = jnp.sqrt(jnp.sum(diff * diff, axis=-1, keepdims=True))     # (tb, 1)
        row_total = row_total + conf * (kl + dist)                        # conf baked as constant

    if mask_rows:  # static flag: only emitted when the padded batch has fake rows
        block = g * tiles_per_group + i
        row = block * tile_rows + lax.broadcasted_iota(jnp.int32, (tile_rows, 1), 0)
        row_total = jnp.where(row < batch, row_total, 0.0)

    out_ref[...] = out_ref[...] + jnp.sum(row_total)


def cross_disease_consistency_loss(logits, features, *, tile_rows=None, core_groups=2):
    """logits: (B, 14); features: (B, 14, D). Returns scalar float32 loss.

    `features` may be bf16 end-to-end (halves the dominant HBM stream); all
    math runs in f32 inside the kernel.
    """
    B, C = logits.shape
    Bf, Cf, D = features.shape
    assert B == Bf and C == Cf == NUM_DISEASES

    # Lane-dense feature layout (free reshape of contiguous trailing dims).
    feats2d = features.reshape(B, C * D)
    feat_it = jnp.dtype(features.dtype).itemsize

    # Per-generation VMEM budget: <=48 MiB on v7x (64 MiB core), up to 96 MiB on
    # v5e/v6e (128 MiB).  Double-buffered input blocks get ~1/3 of it; the rest
    # is headroom for in-kernel temporaries.
    try:
        cap = int(pltpu.get_tpu_info().vmem_capacity_bytes)
    except Exception:
        cap = 64 * 1024 * 1024
    vmem_limit = int(min(96 << 20, max(32 << 20, (cap * 3) // 4)))

    per_row_bytes = _round_up(C * D, 128) * feat_it + 128 * 4  # features + logits (lane-padded)
    if tile_rows is None:
        tb = (vmem_limit // 3) // (2 * per_row_bytes)
        tb = min(tb, 8192)
    else:
        tb = int(tile_rows)

    G = max(1, int(core_groups))
    rows_per_group = _cdiv(B, G)
    tb = min(tb, rows_per_group)
    tb = max(16, _round_up(tb, 16))          # sublane-tile friendly for f32 and bf16
    T = _cdiv(rows_per_group, tb)
    b_pad = G * T * tb

    mask_rows = (b_pad != B)
    if mask_rows:
        extra = b_pad - B
        logits = jnp.pad(logits, ((0, extra), (0, 0)))
        feats2d = jnp.pad(feats2d, ((0, extra), (0, 0)))

    def row_block_map(g, i):
        return (g * T + i, 0)

    kernel = functools.partial(
        _consistency_kernel, feat_dim=D, tile_rows=tb, tiles_per_group=T,
        batch=B, mask_rows=mask_rows)

    out = pl.pallas_call(
        kernel,
        out_shape=jax.ShapeDtypeStruct((G * 8, 128), jnp.float32),
        grid=(G, T),
        in_specs=[
            pl.BlockSpec((tb, C), row_block_map),
            pl.BlockSpec((tb, C * D), row_block_map),
        ],
        out_specs=pl.BlockSpec((8, 128), lambda g, i: (g, 0)),
        compiler_params=pltpu.CompilerParams(
            dimension_semantics=("parallel", "arbitrary"),
            vmem_limit_bytes=vmem_limit,
        ),
    )(logits, feats2d)

    partials = out[::8, 0]                    # one element per core-group block
    return jnp.sum(partials) * (1.0 / (B * NUM_PAIRS))


def _reference_loss(logits, features):
    """Pure-JAX reference mirroring the PyTorch forward (with xlogy(0,0)=0 guard)."""
    probs = jax.nn.sigmoid(logits.astype(jnp.float32))
    feats = features.astype(jnp.float32)
    loss = 0.0
    for i1, i2, c in PAIRS:
        p1 = probs[:, i1]
        p2 = probs[:, i2]
        kl = p2 * (jnp.log(jnp.maximum(p2, 1e-30)) - jnp.log(p1 + 1e-10))
        dist = jnp.linalg.norm(feats[:, i1] - feats[:, i2], axis=1)
        loss = loss + jnp.mean(c * kl + c * dist)
    return loss / NUM_PAIRS


if __name__ == "__main__":
    key = jax.random.PRNGKey(0)
    k1, k2, k3, k4, k5, k6 = jax.random.split(key, 6)
    C, D = NUM_DISEASES, 32

    # Small demo shapes: batch=2, 14 disease channels, feature dim 32.
    B = 2
    logits = jax.random.normal(k1, (B, C), dtype=jnp.float32)
    features = jax.random.normal(k2, (B, C, D), dtype=jnp.float32)
    loss = cross_disease_consistency_loss(logits, features)
    jax.block_until_ready(loss)
    ref = _reference_loss(logits, features)
    assert jnp.allclose(loss, ref, rtol=1e-5, atol=1e-5), (loss, ref)

    # Multi-tile grid + batch padding/mask + both core groups.
    B2 = 72
    logits2 = jax.random.normal(k3, (B2, C), dtype=jnp.float32)
    features2 = jax.random.normal(k4, (B2, C, D), dtype=jnp.float32)
    loss2 = cross_disease_consistency_loss(logits2, features2, tile_rows=16)
    jax.block_until_ready(loss2)
    ref2 = _reference_loss(logits2, features2)
    assert jnp.allclose(loss2, ref2, rtol=1e-5, atol=1e-5), (loss2, ref2)

    # bf16 feature path (halves the dominant HBM stream; math stays f32 in-kernel).
    B3 = 32
    logits3 = jax.random.normal(k5, (B3, C), dtype=jnp.float32)
    features3 = jax.random.normal(k6, (B3, C, D), dtype=jnp.bfloat16)
    loss3 = cross_disease_consistency_loss(logits3, features3)
    jax.block_until_ready(loss3)
    ref3 = _reference_loss(logits3, features3)
    assert jnp.allclose(loss3, ref3, rtol=1e-3, atol=1e-3), (loss3, ref3)

    print("KERNEL_OK")
</pallas_src>

<mosaic_0001>
module attributes {stable_mosaic.version = 11 : i64} {
  func.func @_consistency_kernel(%arg0: i32, %arg1: i32, %arg2: memref<16x14xf32, #tpu.memory_space<vmem>>, %arg3: memref<16x448xf32, #tpu.memory_space<vmem>>, %arg4: memref<8x128xf32, #tpu.memory_space<vmem>>) attributes {dimension_semantics = [#tpu.dimension_semantics<parallel>, #tpu.dimension_semantics<arbitrary>], iteration_bounds = array<i64: 2, 1>, scalar_prefetch = 0 : i64, scratch_operands = 0 : i64, tpu.core_type = #tpu.core_type<tc>, window_params = [{transform_indices = @transform_0, window_bounds = array<i64: 16, 14>}, {transform_indices = @transform_1, window_bounds = array<i64: 16, 448>}, {transform_indices = @transform_2, window_bounds = array<i64: 8, 128>}]} {
    %c0_i32 = arith.constant 0 : i32
    %0 = arith.cmpi eq, %arg1, %c0_i32 : i32
    %1 = arith.extui %0 : i1 to i32
    %c0_i32_0 = arith.constant 0 : i32
    %2 = arith.cmpi ne, %1, %c0_i32_0 : i32
    scf.if %2 {
      %cst_25 = arith.constant 0.000000e+00 : f32
      %132 = vector.broadcast %cst_25 : f32 to vector<8x128xf32>
      %c0_26 = arith.constant 0 : index
      %c0_27 = arith.constant 0 : index
      %133 = vector.load %arg4[%c0_26, %c0_27] : memref<8x128xf32, #tpu.memory_space<vmem>>, vector<8x128xf32>
      tpu.vector_store %arg4[%c0_26, %c0_27], %132 {strides = array<i32>} : memref<8x128xf32, #tpu.memory_space<vmem>>, vector<8x128xf32>,
    } else {
    }
    %c0 = arith.constant 0 : index
    %c0_1 = arith.constant 0 : index
    %3 = vector.load %arg2[%c0, %c0_1] : memref<16x14xf32, #tpu.memory_space<vmem>>, vector<16x14xf32>
    %4 = arith.negf %3 : vector<16x14xf32>
    %5 = math.exp %4 : vector<16x14xf32>
    %cst = arith.constant 1.000000e+00 : f32
    %6 = vector.broadcast %cst : f32 to vector<16x14xf32>
    %7 = arith.addf %6, %5 : vector<16x14xf32>
    %8 = arith.divf %6, %7 : vector<16x14xf32>
    %cst_2 = arith.constant 1.000000e-10 : f32
    %9 = vector.broadcast %cst_2 : f32 to vector<16x14xf32>
    %10 = arith.addf %8, %9 : vector<16x14xf32>
    %11 = math.log %10 : vector<16x14xf32>
    %cst_3 = arith.constant 1.000000e-30 : f32
    %12 = vector.broadcast %cst_3 : f32 to vector<16x14xf32>
    %13 = arith.maximumf %8, %12 : vector<16x14xf32>
    %14 = math.log %13 : vector<16x14xf32>
    %15 = arith.mulf %8, %14 : vector<16x14xf32>
    %c0_4 = arith.constant 0 : index
    %c0_5 = arith.constant 0 : index
    %16 = vector.load %arg3[%c0_4, %c0_5] : memref<16x448xf32, #tpu.memory_space<vmem>>, vector<16x448xf32>
    %cst_6 = arith.constant 0.000000e+00 : f32
    %17 = vector.broadcast %cst_6 : f32 to vector<16x1xf32>
    %18 = vector.extract_strided_slice %15 {offsets = [0, 12], sizes = [16, 1], strides = [1, 1]} : vector<16x14xf32> to vector<16x1xf32>
    %19 = vector.extract_strided_slice %8 {offsets = [0, 12], sizes = [16, 1], strides = [1, 1]} : vector<16x14xf32> to vector<16x1xf32>
    %20 = vector.extract_strided_slice %11 {offsets = [0, 2], sizes = [16, 1], strides = [1, 1]} : vector<16x14xf32> to vector<16x1xf32>
    %21 = arith.mulf %19, %20 : vector<16x1xf32>
    %22 = arith.subf %18, %21 : vector<16x1xf32>
    %23 = vector.extract_strided_slice %16 {offsets = [0, 64], sizes = [16, 32], strides = [1, 1]} : vector<16x448xf32> to vector<16x32xf32>
    %24 = vector.extract_strided_slice %16 {offsets = [0, 384], sizes = [16, 32], strides = [1, 1]} : vector<16x448xf32> to vector<16x32xf32>
    %25 = arith.subf %23, %24 : vector<16x32xf32>
    %26 = arith.mulf %25, %25 : vector<16x32xf32>
    %cst_7 = arith.constant dense<0.000000e+00> : vector<16xf32>
    %27 = vector.multi_reduction <add>, %26, %cst_7 [1] : vector<16x32xf32> to vector<16xf32>
    %28 = vector.shape_cast %27 : vector<16xf32> to vector<16x1xf32>
    %29 = math.sqrt %28 : vector<16x1xf32>
    %30 = arith.addf %22, %29 : vector<16x1xf32>
    %cst_8 = arith.constant 8.000000e-01 : f32
    %31 = vector.broadcast %cst_8 : f32 to vector<16x1xf32>
    %32 = arith.mulf %31, %30 : vector<16x1xf32>
    %33 = arith.addf %17, %32 : vector<16x1xf32>
    %34 = vector.extract_strided_slice %15 {offsets = [0, 6], sizes = [16, 1], strides = [1, 1]} : vector<16x14xf32> to vector<16x1xf32>
    %35 = vector.extract_strided_slice %8 {offsets = [0, 6], sizes = [16, 1], strides = [1, 1]} : vector<16x14xf32> to vector<16x1xf32>
    %36 = vector.extract_strided_slice %11 {offsets = [0, 3], sizes = [16, 1], strides = [1, 1]} : vector<16x14xf32> to vector<16x1xf32>
    %37 = arith.mulf %35, %36 : vector<16x1xf32>
    %38 = arith.subf %34, %37 : vector<16x1xf32>
    %39 = vector.extract_strided_slice %16 {offsets = [0, 96], sizes = [16, 32], strides = [1, 1]} : vector<16x448xf32> to vector<16x32xf32>
    %40 = vector.extract_strided_slice %16 {offsets = [0, 192], sizes = [16, 32], strides = [1, 1]} : vector<16x448xf32> to vector<16x32xf32>
    %41 = arith.subf %39, %40 : vector<16x32xf32>
    %42 = arith.mulf %41, %41 : vector<16x32xf32>
    %cst_9 = arith.constant dense<0.000000e+00> : vector<16xf32>
    %43 = vector.multi_reduction <add>, %42, %cst_9 [1] : vector<16x32xf32> to vector<16xf32>
    %44 = vector.shape_cast %43 : vector<16xf32> to vector<16x1xf32>
    %45 = math.sqrt %44 : vector<16x1xf32>
    %46 = arith.addf %38, %45 : vector<16x1xf32>
    %cst_10 = arith.constant 0.699999988 : f32
    %47 = vector.broadcast %cst_10 : f32 to vector<16x1xf32>
    %48 = arith.mulf %47, %46 : vector<16x1xf32>
    %49 = arith.addf %33, %48 : vector<16x1xf32>
    %50 = vector.extract_strided_slice %15 {offsets = [0, 5], sizes = [16, 1], strides = [1, 1]} : vector<16x14xf32> to vector<16x1xf32>
    %51 = vector.extract_strided_slice %8 {offsets = [0, 5], sizes = [16, 1], strides = [1, 1]} : vector<16x14xf32> to vector<16x1xf32>
    %52 = vector.extract_strided_slice %11 {offsets = [0, 4], sizes = [16, 1], strides = [1, 1]} : vector<16x14xf32> to vector<16x1xf32>
    %53 = arith.mulf %51, %52 : vector<16x1xf32>
    %54 = arith.subf %50, %53 : vector<16x1xf32>
    %55 = vector.extract_strided_slice %16 {offsets = [0, 128], sizes = [16, 32], strides = [1, 1]} : vector<16x448xf32> to vector<16x32xf32>
    %56 = vector.extract_strided_slice %16 {offsets = [0, 160], sizes = [16, 32], strides = [1, 1]} : vector<16x448xf32> to vector<16x32xf32>
    %57 = arith.subf %55, %56 : vector<16x32xf32>
    %58 = arith.mulf %57, %57 : vector<16x32xf32>
    %cst_11 = arith.constant dense<0.000000e+00> : vector<16xf32>
    %59 = vector.multi_reduction <add>, %58, %cst_11 [1] : vector<16x32xf32> to vector<16xf32>
    %60 = vector.shape_cast %59 : vector<16xf32> to vector<16x1xf32>
    %61 = math.sqrt %60 : vector<16x1xf32>
    %62 = arith.addf %54, %61 : vector<16x1xf32>
    %cst_12 = arith.constant 6.000000e-01 : f32
    %63 = vector.broadcast %cst_12 : f32 to vector<16x1xf32>
    %64 = arith.mulf %63, %62 : vector<16x1xf32>
    %65 = arith.addf %49, %64 : vector<16x1xf32>
    %66 = vector.extract_strided_slice %15 {offsets = [0, 2], sizes = [16, 1], strides = [1, 1]} : vector<16x14xf32> to vector<16x1xf32>
    %67 = vector.extract_strided_slice %8 {offsets = [0, 2], sizes = [16, 1], strides = [1, 1]} : vector<16x14xf32> to vector<16x1xf32>
    %68 = vector.extract_strided_slice %11 {offsets = [0, 9], sizes = [16, 1], strides = [1, 1]} : vector<16x14xf32> to vector<16x1xf32>
    %69 = arith.mulf %67, %68 : vector<16x1xf32>
    %70 = arith.subf %66, %69 : vector<16x1xf32>
    %71 = vector.extract_strided_slice %16 {offsets = [0, 288], sizes = [16, 32], strides = [1, 1]} : vector<16x448xf32> to vector<16x32xf32>
    %72 = vector.extract_strided_slice %16 {offsets = [0, 64], sizes = [16, 32], strides = [1, 1]} : vector<16x448xf32> to vector<16x32xf32>
    %73 = arith.subf %71, %72 : vector<16x32xf32>
    %74 = arith.mulf %73, %73 : vector<16x32xf32>
    %cst_13 = arith.constant dense<0.000000e+00> : vector<16xf32>
    %75 = vector.multi_reduction <add>, %74, %cst_13 [1] : vector<16x32xf32> to vector<16xf32>
    %76 = vector.shape_cast %75 : vector<16xf32> to vector<16x1xf32>
    %77 = math.sqrt %76 : vector<16x1xf32>
    %78 = arith.addf %70, %77 : vector<16x1xf32>
    %cst_14 = arith.constant 0.699999988 : f32
    %79 = vector.broadcast %cst_14 : f32 to vector<16x1xf32>
    %80 = arith.mulf %79, %78 : vector<16x1xf32>
    %81 = arith.addf %65, %80 : vector<16x1xf32>
    %82 = vector.extract_strided_slice %15 {offsets = [0, 11], sizes = [16, 1], strides = [1, 1]} : vector<16x14xf32> to vector<16x1xf32>
    %83 = vector.extract_strided_slice %8 {offsets = [0, 11], sizes = [16, 1], strides = [1, 1]} : vector<16x14xf32> to vector<16x1xf32>
    %84 = vector.extract_strided_slice %11 {offsets = [0, 10], sizes = [16, 1], strides = [1, 1]} : vector<16x14xf32> to vector<16x1xf32>
    %85 = arith.mulf %83, %84 : vector<16x1xf32>
    %86 = arith.subf %82, %85 : vector<16x1xf32>
    %87 = vector.extract_strided_slice %16 {offsets = [0, 320], sizes = [16, 32], strides = [1, 1]} : vector<16x448xf32> to vector<16x32xf32>
    %88 = vector.extract_strided_slice %16 {offsets = [0, 352], sizes = [16, 32], strides = [1, 1]} : vector<16x448xf32> to vector<16x32xf32>
    %89 = arith.subf %87, %88 : vector<16x32xf32>
    %90 = arith.mulf %89, %89 : vector<16x32xf32>
    %cst_15 = arith.constant dense<0.000000e+00> : vector<16xf32>
    %91 = vector.multi_reduction <add>, %90, %cst_15 [1] : vector<16x32xf32> to vector<16xf32>
    %92 = vector.shape_cast %91 : vector<16xf32> to vector<16x1xf32>
    %93 = math.sqrt %92 : vector<16x1xf32>
    %94 = arith.addf %86, %93 : vector<16x1xf32>
    %cst_16 = arith.constant 5.000000e-01 : f32
    %95 = vector.broadcast %cst_16 : f32 to vector<16x1xf32>
    %96 = arith.mulf %95, %94 : vector<16x1xf32>
    %97 = arith.addf %81, %96 : vector<16x1xf32>
    %98 = vector.extract_strided_slice %15 {offsets = [0, 8], sizes = [16, 1], strides = [1, 1]} : vector<16x14xf32> to vector<16x1xf32>
    %99 = vector.extract_strided_slice %8 {offsets = [0, 8], sizes = [16, 1], strides = [1, 1]} : vector<16x14xf32> to vector<16x1xf32>
    %100 = vector.extract_strided_slice %11 {offsets = [0, 6], sizes = [16, 1], strides = [1, 1]} : vector<16x14xf32> to vector<16x1xf32>
    %101 = arith.mulf %99, %100 : vector<16x1xf32>
    %102 = arith.subf %98, %101 : vector<16x1xf32>
    %103 = vector.extract_strided_slice %16 {offsets = [0, 192], sizes = [16, 32], strides = [1, 1]} : vector<16x448xf32> to vector<16x32xf32>
    %104 = vector.extract_strided_slice %16 {offsets = [0, 256], sizes = [16, 32], strides = [1, 1]} : vector<16x448xf32> to vector<16x32xf32>
    %105 = arith.subf %103, %104 : vector<16x32xf32>
    %106 = arith.mulf %105, %105 : vector<16x32xf32>
    %cst_17 = arith.constant dense<0.000000e+00> : vector<16xf32>
    %107 = vector.multi_reduction <add>, %106, %cst_17 [1] : vector<16x32xf32> to vector<16xf32>
    %108 = vector.shape_cast %107 : vector<16xf32> to vector<16x1xf32>
    %109 = math.sqrt %108 : vector<16x1xf32>
    %110 = arith.addf %102, %109 : vector<16x1xf32>
    %cst_18 = arith.constant 8.000000e-01 : f32
    %111 = vector.broadcast %cst_18 : f32 to vector<16x1xf32>
    %112 = arith.mulf %111, %110 : vector<16x1xf32>
    %113 = arith.addf %97, %112 : vector<16x1xf32>
    %c1_i32 = arith.constant 1 : i32
    %114 = arith.muli %arg0, %c1_i32 : i32
    %115 = arith.addi %114, %arg1 : i32
    %c16_i32 = arith.constant 16 : i32
    %116 = arith.muli %115, %c16_i32 : i32
    %117 = tpu.iota {dimensions = array<i32: 0>} : vector<16x1xi32>
    %118 = vector.broadcast %116 : i32 to vector<16x1xi32>
    %119 = arith.addi %118, %117 : vector<16x1xi32>
    %c2_i32 = arith.constant 2 : i32
    %120 = vector.broadcast %c2_i32 : i32 to vector<16x1xi32>
    %121 = arith.cmpi slt, %119, %120 : vector<16x1xi32>
    %cst_19 = arith.constant 0.000000e+00 : f32
    %122 = vector.broadcast %cst_19 : f32 to vector<16x1xf32>
    %123 = arith.select %121, %113, %122 : vector<16x1xi1>, vector<16x1xf32>
    %c0_20 = arith.constant 0 : index
    %c0_21 = arith.constant 0 : index
    %124 = vector.load %arg4[%c0_20, %c0_21] : memref<8x128xf32, #tpu.memory_space<vmem>>, vector<8x128xf32>
    %125 = vector.shape_cast %123 : vector<16x1xf32> to vector<1x16x1xf32>
    %cst_22 = arith.constant dense<0.000000e+00> : vector<1xf32>
    %126 = vector.multi_reduction <add>, %125, %cst_22 [1, 2] : vector<1x16x1xf32> to vector<1xf32>
    %127 = vector.shape_cast %126 : vector<1xf32> to vector<1x1x1xf32>
    %128 = vector.extract %127[0, 0, 0] : f32 from vector<1x1x1xf32>
    %129 = vector.broadcast %128 : f32 to vector<8x128xf32>
    %130 = arith.addf %124, %129 : vector<8x128xf32>
    %c0_23 = arith.constant 0 : index
    %c0_24 = arith.constant 0 : index
    %131 = vector.load %arg4[%c0_23, %c0_24] : memref<8x128xf32, #tpu.memory_space<vmem>>, vector<8x128xf32>
    tpu.vector_store %arg4[%c0_23, %c0_24], %130 {strides = array<i32>} : memref<8x128xf32, #tpu.memory_space<vmem>>, vector<8x128xf32>,
    return
  }
  func.func @transform_0(%arg0: i32, %arg1: i32) -> (i32, i32) {
    %c1_i32 = arith.constant 1 : i32
    %0 = arith.muli %arg0, %c1_i32 : i32
    %1 = arith.addi %0, %arg1 : i32
    %c0_i32 = arith.constant 0 : i32
    %c0_i32_0 = arith.constant 0 : i32
    return %1, %c0_i32 : i32, i32
  }
  func.func @transform_1(%arg0: i32, %arg1: i32) -> (i32, i32) {
    %c1_i32 = arith.constant 1 : i32
    %0 = arith.muli %arg0, %c1_i32 : i32
    %1 = arith.addi %0, %arg1 : i32
    %c0_i32 = arith.constant 0 : i32
    %c0_i32_0 = arith.constant 0 : i32
    return %1, %c0_i32 : i32, i32
  }
  func.func @transform_2(%arg0: i32, %arg1: i32) -> (i32, i32) {
    %c0_i32 = arith.constant 0 : i32
    %c0_i32_0 = arith.constant 0 : i32
    return %arg0, %c0_i32 : i32, i32
  }
}

</mosaic_0001>

<llo_original>
// kernel: tpu_custom_call.1
$region0: #{tpu_custom_call.1}
  #allocation0 [shape = 'u32[]', space=smem, size = 0x4, offset = 0x4, fixed_abs, tag = 'smem constant byte address 0x4 - core index']
  #allocation1 [shape = 'u32[72,128]{1,0:T(1,128)}', space=vmem, size = 0x9000, scoped, tag = 'internal scratch']
  %s0 = inlined_call_operand.vmem [shape: f32[32,14], index: 0, kind: input, shape index: {}]
  %s1 = inlined_call_operand.hbm [shape: f32[32,448], index: 1, kind: input, shape index: {}]
  %s2 = inlined_call_operand.hbm [shape: f32[16,128], index: 2, kind: output, shape index: {}]
  %s3 = sld [smem:[#allocation0]]
  $region49: #{tpu_custom_call.1} parent=0
    _
  %s5 = ssub.s32 1, %s3
  %s6 = scalar_select 0, %s5, %s3
  $region1: #{tpu_custom_call.1} parent=0
    #allocation2 [shape = 'u8[65536]{0}', space=vmem, size = 0x10000, scoped, tag = 'input window, operand 1']
    #allocation3 [shape = 's32[2]{0}', space=sflag, size = 0x8, scoped, tag = 'scoped memory for tpu_custom_call.1']
    #allocation4 [shape = 's32[2]{0}', space=sflag, size = 0x8, scoped, tag = 'scoped memory for tpu_custom_call.1']
    #allocation5 [shape = 'u8[8192]{0}', space=vmem, size = 0x2000, scoped, tag = 'output window, operand 0']
    %7 = vsyncpa [#allocation3], 0
    %s8 = scalar_lea.sflag [#allocation3], 1
    %9 = vsyncpa %s8, 0
    %10 = vsyncpa [#allocation4], 0
    %s11 = scalar_lea.sflag [#allocation4], 1
    %12 = vsyncpa %s11, 0
    loop: start=0, step=1, limit=4
    $region2: #{tpu_custom_call.1} parent=1 // loop_pre_header
      _
    $region3: #{tpu_custom_call.1} parent=1 // loop_header
      %s14 = sphi 0, %s18
      %p15 = scmp.ge.s32.totalorder %s14, 4
      %s21 = sphi 0, %s33
      %s22 = sphi 0, %s29
      %s23 = sphi 0, %s21
      %s24 = sphi 0, %s22
      %s25 = sphi 0, %s23
      %s26 = sphi 0, %s24
      %s38 = sphi 0, %s40
      %s41 = sphi 0, %s38
      %s42 = sphi 0, %s41
      %s58 = sphi 0, %s42
      %s66 = sphi 0, %s68
      %s69 = sphi 0, %s66
      %s70 = sphi 0, %s69
      %s86 = sphi 0, %s70
      %s92 = sphi 0, %s94
      %s95 = sphi 0, %s92
      %s96 = sphi 0, %s95
      %s112 = sphi 0, %s96
    $region4: #{tpu_custom_call.1} parent=1 // loop_header_branch
      %17 = sbr.rel (%p15) target = $region8
    $region5: #{tpu_custom_call.1} parent=1 // loop_body
      %s19 = ssub.s32 %s14, 1
      %s20 = ssub.s32 %s14, 2
      %s27 = sadd.s32 1, %s22
      %p28 = scmp.ge.s32.totalorder %s27, 1
      %s29 = scalar_select %p28, 0, %s27
      %s30 = sadd.s32 1, %s21
      %s31 = scalar_select %p28, %s30, %s21
      %p32 = scmp.ge.s32.totalorder %s31, 2
      %s33 = scalar_select %p32, 0, %s31
      %s34 = sadd.s32 %s21, %s22
      %s35 = sadd.s32 %s33, %s29
      %s36 = ssub.s32 %s34, %s35
      %p37 = scmp.eq.s32.totalorder %s36, 0
      %s39 = sadd.s32 %s38, 1
      %s40 = scalar_select %p37, %s38, %s39
      %p43 = pneg %p37
      %p44 = scmp.eq.s32.totalorder %s14, 1
      %p45 = por %p43, %p44
      %p46 = scmp.ne.s32.totalorder %s38, %s41
      %p47 = scmp.eq.s32.totalorder %s14, 0
      %p48 = por %p46, %p47
      %p49 = scmp.ne.s32.totalorder %s38, %s41
      %p50 = scmp.eq.s32.totalorder %s19, 1
      %p51 = por %p49, %p50
      %p52 = scmp.ne.s32.totalorder %s41, %s42
      %p53 = scmp.eq.s32.totalorder %s19, 0
      %p54 = por %p52, %p53
      %p55 = scmp.ne.s32.totalorder %s41, %s42
      %p56 = scmp.eq.s32.totalorder %s20, 1
      %p57 = por %p55, %p56
      %p59 = scmp.ne.s32.totalorder %s42, %s58
      %p60 = scmp.eq.s32.totalorder %s20, 0
      %p61 = por %p59, %p60
      %s62 = sadd.s32 %s21, %s22
      %s63 = sadd.s32 %s33, %s29
      %s64 = ssub.s32 %s62, %s63
      %p65 = scmp.eq.s32.totalorder %s64, 0
      %s67 = sadd.s32 %s66, 1
      %s68 = scalar_select %p65, %s66, %s67
      %p71 = pneg %p65
      %p72 = scmp.eq.s32.totalorder %s14, 1
      %p73 = por %p71, %p72
      %p74 = scmp.ne.s32.totalorder %s66, %s69
      %p75 = scmp.eq.s32.totalorder %s14, 0
      %p76 = por %p74, %p75
      %p77 = scmp.ne.s32.totalorder %s66, %s69
      %p78 = scmp.eq.s32.totalorder %s19, 1
      %p79 = por %p77, %p78
      %p80 = scmp.ne.s32.totalorder %s69, %s70
      %p81 = scmp.eq.s32.totalorder %s19, 0
      %p82 = por %p80, %p81
      %p83 = scmp.ne.s32.totalorder %s69, %s70
      %p84 = scmp.eq.s32.totalorder %s20, 1
      %p85 = por %p83, %p84
      %p87 = scmp.ne.s32.totalorder %s70, %s86
      %p88 = scmp.eq.s32.totalorder %s20, 0
      %p89 = por %p87, %p88
      %s90 = ssub.s32 %s21, %s33
      %p91 = scmp.eq.s32.totalorder %s90, 0
      %s93 = sadd.s32 %s92, 1
      %s94 = scalar_select %p91, %s92, %s93
      %p97 = pneg %p91
      %p98 = scmp.eq.s32.totalorder %s14, 1
      %p99 = por %p97, %p98
      %p100 = scmp.ne.s32.totalorder %s92, %s95
      %p101 = scmp.eq.s32.totalorder %s14, 0
      %p102 = por %p100, %p101
      %p103 = scmp.ne.s32.totalorder %s92, %s95
      %p104 = scmp.eq.s32.totalorder %s19, 1
      %p105 = por %p103, %p104
      %p106 = scmp.ne.s32.totalorder %s95, %s96
      %p107 = scmp.eq.s32.totalorder %s19, 0
      %p108 = por %p106, %p107
      %p109 = scmp.ne.s32.totalorder %s95, %s96
      %p110 = scmp.eq.s32.totalorder %s20, 1
      %p111 = por %p109, %p110
      %p113 = scmp.ne.s32.totalorder %s96, %s112
      %p114 = scmp.eq.s32.totalorder %s20, 0
      %p115 = por %p113, %p114
      %p116 = scmp.le.s32.totalorder 1, %s14
      %p117 = scmp.lt.s32.totalorder %s14, 3
      %p118 = pnand %p116, %p117
      %p119 = pneg %p118
      // Predicated region
      $region9: #{tpu_custom_call.1} parent=5 // pred_check
        _
      $region10: #{tpu_custom_call.1} parent=5 // pred_check_branch
        %121 = sbr.rel (%p118) target = $region12
      $region11: #{tpu_custom_call.1} parent=5 // pred_region
        %s122 = ssub.s32 %s14, 1
      $region12: #{tpu_custom_call.1} parent=5 // pred_fallthru
        _
      %p123 = scmp.lt.s32.totalorder %s14, 2
      // Predicated region
      $region13: #{tpu_custom_call.1} parent=5 // pred_check
        %p124 = pneg %p123
      $region14: #{tpu_custom_call.1} parent=5 // pred_check_branch
        %126 = sbr.rel (%p124) target = $region16
      $region15: #{tpu_custom_call.1} parent=5 // pred_region
        // Predicated region
        $region17: #{tpu_custom_call.1} parent=15 // pred_check
          %p127 = pneg %p48
        $region18: #{tpu_custom_call.1} parent=15 // pred_check_branch
          %129 = sbr.rel (%p127) target = $region20
        $region19: #{tpu_custom_call.1} parent=15 // pred_region
          %s130 = sadd.s32 %s21, %s22
          %s131 = smul.u32 2, %s130
          %p132 = scmp.lt.s32.totalorder %s131, 3
          %s133 = scalar_select %p132, %s131, 3
          %s134 = smul.addr %s133, 8
          %s135 = scalar_lea.vmem %s0, %s134
          %s136 = sadd.s32 %s21, %s22
          %s137 = smul.u32 2, %s136
        $region20: #{tpu_custom_call.1} parent=15 // pred_fallthru
          _
        // Predicated region
        $region21: #{tpu_custom_call.1} parent=15 // pred_check
          %p138 = pneg %p76
        $region22: #{tpu_custom_call.1} parent=15 // pred_check_branch
          %140 = sbr.rel (%p138) target = $region24
        $region23: #{tpu_custom_call.1} parent=15 // pred_region
          %s141 = sand.u32 %s66, 1
          %s142 = scalar_lea.sflag [#allocation3], %s141
          %s143 = sand.u32 %s66, 1
          %s144 = smul.addr %s143, 64
          %s145 = scalar_lea.vmem [#allocation2], %s144
          %s146 = sadd.s32 %s21, %s22
          %s147 = smul.u32 2, %s146
          %149 = vsyncadd %s142, 0
          %s150 = smul.addr %s147, 4
          %s151 = smul.addr %s150, 8
          %s152 = scalar_lea.hbm %s1, %s151
          %s153 = sshll.u32 %s152, 4
          %s154 = int_to_ptr.hbm [resolvable:$true] %s153
          %s155 = sshll.u32 %s145, 4
          %s156 = int_to_ptr.vmem [resolvable:$true] %s155
          %161 = dma.hbm_to_vmem [thread:$0]  %s154, 1024, %s156, %s142, 512, 512, 32
        $region24: #{tpu_custom_call.1} parent=15 // pred_fallthru
          _
      $region16: #{tpu_custom_call.1} parent=5 // pred_fallthru
        _
      %p162 = scmp.le.s32.totalorder 1, %s14
      %p163 = scmp.lt.s32.totalorder %s14, 3
      %p164 = pnand %p162, %p163
      %p165 = pneg %p164
      // Predicated region
      $region25: #{tpu_custom_call.1} parent=5 // pred_check
        _
      $region26: #{tpu_custom_call.1} parent=5 // pred_check_branch
        %167 = sbr.rel (%p164) target = $region28
      $region27: #{tpu_custom_call.1} parent=5 // pred_region
        %s168 = ssub.s32 %s14, 1
        %s169 = sand.u32 %s69, 1
        %s170 = scalar_lea.sflag [#allocation3], %s169
        %s171 = sand.u32 %s69, 1
        %s172 = smul.addr %s171, 64
        %s173 = scalar_lea.vmem [#allocation2], %s172
        // Predicated region
        $region29: #{tpu_custom_call.1} parent=27 // pred_check
          %p174 = pneg %p82
        $region30: #{tpu_custom_call.1} parent=27 // pred_check_branch
          %176 = sbr.rel (%p174) target = $region32
        $region31: #{tpu_custom_call.1} parent=27 // pred_region
          %178 = dma.done %s170, 1024
        $region32: #{tpu_custom_call.1} parent=27 // pred_fallthru
          _
        %s179 = sadd.s32 %s23, %s24
        %s180 = smul.u32 2, %s179
        %p181 = scmp.lt.s32.totalorder %s180, 3
        %s182 = scalar_select %p181, %s180, 3
        %s183 = smul.addr %s182, 8
        %s184 = scalar_lea.vmem %s0, %s183
        %p185 = pneg %p54
        %p186 = pneg %p51
        %s187 = sand.u32 %s69, 1
        %s188 = scalar_lea.sflag [#allocation3], %s187
        %s189 = sand.u32 %s69, 1
        %s190 = smul.addr %s189, 64
        %s191 = scalar_lea.vmem [#allocation2], %s190
        %p192 = pneg %p82
        %p193 = pneg %p79
        %p194 = pneg %p108
        %p195 = pneg %p105
        %s196 = sand.u32 %s95, 1
        %s197 = scalar_lea.sflag [#allocation4], %s196
        %s198 = sand.u32 %s95, 1
        %s199 = smul.addr %s198, 8
        %s200 = scalar_lea.vmem [#allocation5], %s199
        %s201 = sadd.s32 %s23, %s24
        %s202 = smul.u32 2, %s201
        %p203 = scmp.lt.s32.totalorder %s202, 3
        %s204 = scalar_select %p203, %s202, 3
        %s205 = smul.addr %s204, 8
        %s206 = scalar_lea.vmem %s0, %s205
        %s207 = sadd.s32 %s23, %s24
        %s208 = smul.u32 2, %s207
        %s209 = sadd.s32 %s23, %s24
        %s210 = smul.u32 2, %s209
        %p211 = scmp.eq.s32.totalorder %s24, 0
        // Predicated region
        $region33: #{tpu_custom_call.1} parent=27 // pred_check
          %p212 = pneg %p211
        $region34: #{tpu_custom_call.1} parent=27 // pred_check_branch
          %214 = sbr.rel (%p212) target = $region36
        $region35: #{tpu_custom_call.1} parent=27 // pred_region
          %215 = vst [vmem:[%s200] sm:$0xff] 0.0
        $region36: #{tpu_custom_call.1} parent=27 // pred_fallthru
          _
        %v216 = vld [vmem:[%s206] sm:$0xff]
        %v217 = vld [vmem:[%s206 + $0x8] sm:$0xff]
        %v218 = vxor.u32 %v216, 2147483648
        %v219 = vxor.u32 %v217, 2147483648
        %v220 = vmul.f32 %v218, 1.442695
        %v221 = vpow.pop %v220
        %v222 = vmul.f32 %v219, 1.442695
        %v223 = vpow.pop %v222
        %v224 = vadd.f32 %v221, 1.0
        %v225 = vadd.f32 %v223, 1.0
        %v226 = vrcp.pop %v224
        %v227 = vmul.f32 %v224, %v226
        %v228 = vsub.f32 1.0, %v227
        %v229 = vmul.f32 %v226, %v228
        %v230 = vadd.f32 %v226, %v229
        %vm231 = vweird.f32 %v224
        %vm232 = vweird.f32 %v226
        %vm233 = vmor %vm231, %vm232
        %v234 = vsel %vm233, %v226, %v230
        %v235 = vand.u32 2147483647, %v224
        %vm236 = vcmp.eq.f32.partialorder %v235, 8.507059e+37
        %v237 = vand.u32 %v224, 2147483648
        %v238 = vor.u32 1.1754944e-38, %v237
        %v239 = vsel %vm236, %v238, %v234
        %v240 = vmul.f32 1.0, %v239
        %v241 = vrcp.pop %v225
        %v242 = vmul.f32 %v225, %v241
        %v243 = vsub.f32 1.0, %v242
        %v244 = vmul.f32 %v241, %v243
        %v245 = vadd.f32 %v241, %v244
        %vm246 = vweird.f32 %v225
        %vm247 = vweird.f32 %v241
        %vm248 = vmor %vm246, %vm247
        %v249 = vsel %vm248, %v241, %v245
        %v250 = vand.u32 2147483647, %v225
        %vm251 = vcmp.eq.f32.partialorder %v250, 8.507059e+37
        %v252 = vand.u32 %v225, 2147483648
        %v253 = vor.u32 1.1754944e-38, %v252
        %v254 = vsel %vm251, %v253, %v249
        %v255 = vmul.f32 1.0, %v254
        %v256 = vadd.f32 %v240, 1e-10
        %v257 = vadd.f32 %v255, 1e-10
        %v258 = vlog2.pop %v256
        %v259 = vmul.f32 %v258, 0.6931472
        %v260 = vlog2.pop %v257
        %v261 = vmul.f32 %v260, 0.6931472
        %v262 = vmax.f32 %v240, 1e-30
        %v263 = vmax.f32 %v255, 1e-30
        %v264 = vlog2.pop %v262
        %v265 = vmul.f32 %v264, 0.6931472
        %v266 = vlog2.pop %v263
        %v267 = vmul.f32 %v266, 0.6931472
        %v268 = vmul.f32 %v240, %v265
        %v269 = vmul.f32 %v255, %v267
        %v270 = vld [vmem:[%s173] sm:$0xff]
        %v271 = vld [vmem:[%s173 + $0x8] sm:$0xff]
        %v272 = vld [vmem:[%s173 + $0x10] sm:$0xff]
        %v273 = vld [vmem:[%s173 + $0x18] sm:$0xff]
        %v274 = vld [vmem:[%s173 + $0x20] sm:$0xff]
        %v275 = vld [vmem:[%s173 + $0x28] sm:$0xff]
        %v276 = vld [vmem:[%s173 + $0x30] sm:$0xff]
        %v277 = vld [vmem:[%s173 + $0x38] sm:$0xff]
        %280 = vrot.lane.b32.xlu0 %v259, 10
        %v281 = vpop.permute.xlu0 %280
        %282 = vrot.lane.b32.xlu0 %v261, 10
        %v283 = vpop.permute.xlu0 %282
        %v286 = vmul.f32 %v240, %v281
        %v287 = vmul.f32 %v255, %v283
        %v288 = vsub.f32 %v268, %v286
        %v289 = vsub.f32 %v269, %v287
        %292 = vrot.lane.b32.xlu0 %v273, 64
        %v293 = vpop.permute.xlu0 %292
        %294 = vrot.lane.b32.xlu0 %v277, 64
        %v295 = vpop.permute.xlu0 %294
        %v298 = vsub.f32 %v270, %v293
        %v299 = vsub.f32 %v274, %v295
        %v300 = vmul.f32 %v298, %v298
        %v301 = vmul.f32 %v299, %v299
        %304 = vrot.lane.b32.xlu0 %v300, 64
        %v305 = vpop.permute.xlu0 %304
        %306 = vrot.lane.b32.xlu0 %v301, 64
        %v307 = vpop.permute.xlu0 %306
        %vm310 = vcmask 261120
        %v311 = vsel %vm310, %v305, 0.0
        %312 = vadd.xlane.f32.xlu0 %v311
        %v313 = vpop.xlane.xlu0 %312
        %v314 = vsel %vm310, %v307, 0.0
        %315 = vadd.xlane.f32.xlu0 %v314
        %v316 = vpop.xlane.xlu0 %315
        %v317 = vrsqrt.pop %v313
        %v318 = vmul.f32 %v317, %v313
        %v319 = vmul.f32 %v318, %v317
        %v320 = vmul.f32 0.5, %v319
        %v321 = vsub.f32 1.5, %v320
        %v322 = vmul.f32 %v317, %v321
        %v323 = vmul.f32 %v313, %v322
        %vm324 = vcmp.eq.f32.partialorder %v313, inf
        %v325 = vsel %vm324, %v313, %v323
        %vm326 = vcmp.eq.f32.partialorder %v313, 0.0
        %v327 = vand.u32 %v313, 2147483648
        %v328 = vsel %vm326, %v327, %v325
        %v329 = vrsqrt.pop %v316
        %v330 = vmul.f32 %v329, %v316
        %v331 = vmul.f32 %v330, %v329
        %v332 = vmul.f32 0.5, %v331
        %v333 = vsub.f32 1.5, %v332
        %v334 = vmul.f32 %v329, %v333
        %v335 = vmul.f32 %v316, %v334
        %vm336 = vcmp.eq.f32.partialorder %v316, inf
        %v337 = vsel %vm336, %v316, %v335
        %vm338 = vcmp.eq.f32.partialorder %v316, 0.0
        %v339 = vand.u32 %v316, 2147483648
        %v340 = vsel %vm338, %v339, %v337
        %v341 = vadd.f32 %v288, %v328
        %v342 = vadd.f32 %v289, %v340
        %v343 = vmul.f32 %v341, 0.8
        %v344 = vmul.f32 %v342, 0.8
        %v345 = vadd.f32 %v343, 0.0
        %v346 = vadd.f32 %v344, 0.0
        %347 = vrot.lane.b32.xlu0 %v259, 3
        %v348 = vpop.permute.xlu0 %347
        %349 = vrot.lane.b32.xlu0 %v261, 3
        %v350 = vpop.permute.xlu0 %349
        %v353 = vmul.f32 %v240, %v348
        %v354 = vmul.f32 %v255, %v350
        %v355 = vsub.f32 %v268, %v353
        %v356 = vsub.f32 %v269, %v354
        %359 = vrot.lane.b32.xlu0 %v271, 32
        %v360 = vpop.permute.xlu0 %359
        %361 = vrot.lane.b32.xlu0 %v275, 32
        %v362 = vpop.permute.xlu0 %361
        %v365 = vsub.f32 %v270, %v360
        %v366 = vsub.f32 %v274, %v362
        %v367 = vmul.f32 %v365, %v365
        %v368 = vmul.f32 %v366, %v366
        %371 = vrot.lane.b32.xlu0 %v367, 32
        %v372 = vpop.permute.xlu0 %371
        %373 = vrot.lane.b32.xlu0 %v368, 32
        %v374 = vpop.permute.xlu0 %373
        %v377 = vsel %vm310, %v372, 0.0
        %378 = vadd.xlane.f32.xlu0 %v377
        %v379 = vpop.xlane.xlu0 %378
        %v380 = vsel %vm310, %v374, 0.0
        %381 = vadd.xlane.f32.xlu0 %v380
        %v382 = vpop.xlane.xlu0 %381
        %v383 = vrsqrt.pop %v379
        %v384 = vmul.f32 %v383, %v379
        %v385 = vmul.f32 %v384, %v383
        %v386 = vmul.f32 0.5, %v385
        %v387 = vsub.f32 1.5, %v386
        %v388 = vmul.f32 %v383, %v387
        %v389 = vmul.f32 %v379, %v388
        %vm390 = vcmp.eq.f32.partialorder %v379, inf
        %v391 = vsel %vm390, %v379, %v389
        %vm392 = vcmp.eq.f32.partialorder %v379, 0.0
        %v393 = vand.u32 %v379, 2147483648
        %v394 = vsel %vm392, %v393, %v391
        %v395 = vrsqrt.pop %v382
        %v396 = vmul.f32 %v395, %v382
        %v397 = vmul.f32 %v396, %v395
        %v398 = vmul.f32 0.5, %v397
        %v399 = vsub.f32 1.5, %v398
        %v400 = vmul.f32 %v395, %v399
        %v401 = vmul.f32 %v382, %v400
        %vm402 = vcmp.eq.f32.partialorder %v382, inf
        %v403 = vsel %vm402, %v382, %v401
        %vm404 = vcmp.eq.f32.partialorder %v382, 0.0
        %v405 = vand.u32 %v382, 2147483648
        %v406 = vsel %vm404, %v405, %v403
        %v407 = vadd.f32 %v355, %v394
        %v408 = vadd.f32 %v356, %v406
        %v409 = vmul.f32 %v407, 0.7
        %v410 = vmul.f32 %v408, 0.7
        %413 = vrot.lane.b32.xlu0 %v409, 6
        %v414 = vpop.permute.xlu0 %413
        %415 = vrot.lane.b32.xlu0 %v410, 6
        %v416 = vpop.permute.xlu0 %415
        %v419 = vadd.f32 %v345, %v414
        %v420 = vadd.f32 %v346, %v416
        %421 = vrot.lane.b32.xlu0 %v259, 1
        %v422 = vpop.permute.xlu0 %421
        %423 = vrot.lane.b32.xlu0 %v261, 1
        %v424 = vpop.permute.xlu0 %423
        %v427 = vmul.f32 %v240, %v422
        %v428 = vmul.f32 %v255, %v424
        %v429 = vsub.f32 %v268, %v427
        %v430 = vsub.f32 %v269, %v428
        %431 = vrot.lane.b32.xlu0 %v271, 96
        %v432 = vpop.permute.xlu0 %431
        %433 = vrot.lane.b32.xlu0 %v275, 96
        %v434 = vpop.permute.xlu0 %433
        %v437 = vsub.f32 %v271, %v432
        %v438 = vsub.f32 %v275, %v434
        %v439 = vmul.f32 %v437, %v437
        %v440 = vmul.f32 %v438, %v438
        %v441 = vsel %vm310, %v439, 0.0
        %442 = vadd.xlane.f32.xlu0 %v441
        %v443 = vpop.xlane.xlu0 %442
        %v444 = vsel %vm310, %v440, 0.0
        %445 = vadd.xlane.f32.xlu0 %v444
        %v446 = vpop.xlane.xlu0 %445
        %v447 = vrsqrt.pop %v443
        %v448 = vmul.f32 %v447, %v443
        %v449 = vmul.f32 %v448, %v447
        %v450 = vmul.f32 0.5, %v449
        %v451 = vsub.f32 1.5, %v450
        %v452 = vmul.f32 %v447, %v451
        %v453 = vmul.f32 %v443, %v452
        %vm454 = vcmp.eq.f32.partialorder %v443, inf
        %v455 = vsel %vm454, %v443, %v453
        %vm456 = vcmp.eq.f32.partialorder %v443, 0.0
        %v457 = vand.u32 %v443, 2147483648
        %v458 = vsel %vm456, %v457, %v455
        %v459 = vrsqrt.pop %v446
        %v460 = vmul.f32 %v459, %v446
        %v461 = vmul.f32 %v460, %v459
        %v462 = vmul.f32 0.5, %v461
        %v463 = vsub.f32 1.5, %v462
        %v464 = vmul.f32 %v459, %v463
        %v465 = vmul.f32 %v446, %v464
        %vm466 = vcmp.eq.f32.partialorder %v446, inf
        %v467 = vsel %vm466, %v446, %v465
        %vm468 = vcmp.eq.f32.partialorder %v446, 0.0
        %v469 = vand.u32 %v446, 2147483648
        %v470 = vsel %vm468, %v469, %v467
        %v471 = vadd.f32 %v429, %v458
        %v472 = vadd.f32 %v430, %v470
        %v473 = vmul.f32 %v471, 0.6
        %v474 = vmul.f32 %v472, 0.6
        %477 = vrot.lane.b32.xlu0 %v473, 7
        %v478 = vpop.permute.xlu0 %477
        %479 = vrot.lane.b32.xlu0 %v474, 7
        %v480 = vpop.permute.xlu0 %479
        %v483 = vadd.f32 %v419, %v478
        %v484 = vadd.f32 %v420, %v480
        %485 = vrot.lane.b32.xlu0 %v259, 121
        %v486 = vpop.permute.xlu0 %485
        %487 = vrot.lane.b32.xlu0 %v261, 121
        %v488 = vpop.permute.xlu0 %487
        %v491 = vmul.f32 %v240, %v486
        %v492 = vmul.f32 %v255, %v488
        %v493 = vsub.f32 %v268, %v491
        %v494 = vsub.f32 %v269, %v492
        %497 = vrot.lane.b32.xlu0 %v270, 96
        %v498 = vpop.permute.xlu0 %497
        %499 = vrot.lane.b32.xlu0 %v274, 96
        %v500 = vpop.permute.xlu0 %499
        %v503 = vsub.f32 %v272, %v498
        %v504 = vsub.f32 %v276, %v500
        %v505 = vmul.f32 %v503, %v503
        %v506 = vmul.f32 %v504, %v504
        %509 = vrot.lane.b32.xlu0 %v505, 96
        %v510 = vpop.permute.xlu0 %509
        %511 = vrot.lane.b32.xlu0 %v506, 96
        %v512 = vpop.permute.xlu0 %511
        %v515 = vsel %vm310, %v510, 0.0
        %516 = vadd.xlane.f32.xlu0 %v515
        %v517 = vpop.xlane.xlu0 %516
        %v518 = vsel %vm310, %v512, 0.0
        %519 = vadd.xlane.f32.xlu0 %v518
        %v520 = vpop.xlane.xlu0 %519
        %v521 = vrsqrt.pop %v517
        %v522 = vmul.f32 %v521, %v517
        %v523 = vmul.f32 %v522, %v521
        %v524 = vmul.f32 0.5, %v523
        %v525 = vsub.f32 1.5, %v524
        %v526 = vmul.f32 %v521, %v525
        %v527 = vmul.f32 %v517, %v526
        %vm528 = vcmp.eq.f32.partialorder %v517, inf
        %v529 = vsel %vm528, %v517, %v527
        %vm530 = vcmp.eq.f32.partialorder %v517, 0.0
        %v531 = vand.u32 %v517, 2147483648
        %v532 = vsel %vm530, %v531, %v529
        %v533 = vrsqrt.pop %v520
        %v534 = vmul.f32 %v533, %v520
        %v535 = vmul.f32 %v534, %v533
        %v536 = vmul.f32 0.5, %v535
        %v537 = vsub.f32 1.5, %v536
        %v538 = vmul.f32 %v533, %v537
        %v539 = vmul.f32 %v520, %v538
        %vm540 = vcmp.eq.f32.partialorder %v520, inf
        %v541 = vsel %vm540, %v520, %v539
        %vm542 = vcmp.eq.f32.partialorder %v520, 0.0
        %v543 = vand.u32 %v520, 2147483648
        %v544 = vsel %vm542, %v543, %v541
        %v545 = vadd.f32 %v493, %v532
        %v546 = vadd.f32 %v494, %v544
        %v547 = vmul.f32 %v545, 0.7
        %v548 = vmul.f32 %v546, 0.7
        %551 = vrot.lane.b32.xlu0 %v547, 10
        %v552 = vpop.permute.xlu0 %551
        %553 = vrot.lane.b32.xlu0 %v548, 10
        %v554 = vpop.permute.xlu0 %553
        %v557 = vadd.f32 %v483, %v552
        %v558 = vadd.f32 %v484, %v554
        %561 = vrot.lane.b32.xlu0 %v272, 96
        %v562 = vpop.permute.xlu0 %561
        %563 = vrot.lane.b32.xlu0 %v276, 96
        %v564 = vpop.permute.xlu0 %563
        %v567 = vsub.f32 %v272, %v562
        %v568 = vsub.f32 %v276, %v564
        %v569 = vmul.f32 %v567, %v567
        %v570 = vmul.f32 %v568, %v568
        %573 = vrot.lane.b32.xlu0 %v569, 64
        %v574 = vpop.permute.xlu0 %573
        %575 = vrot.lane.b32.xlu0 %v570, 64
        %v576 = vpop.permute.xlu0 %575
        %v579 = vsel %vm310, %v574, 0.0
        %580 = vadd.xlane.f32.xlu0 %v579
        %v581 = vpop.xlane.xlu0 %580
        %v582 = vsel %vm310, %v576, 0.0
        %583 = vadd.xlane.f32.xlu0 %v582
        %v584 = vpop.xlane.xlu0 %583
        %v585 = vrsqrt.pop %v581
        %v586 = vmul.f32 %v585, %v581
        %v587 = vmul.f32 %v586, %v585
        %v588 = vmul.f32 0.5, %v587
        %v589 = vsub.f32 1.5, %v588
        %v590 = vmul.f32 %v585, %v589
        %v591 = vmul.f32 %v581, %v590
        %vm592 = vcmp.eq.f32.partialorder %v581, inf
        %v593 = vsel %vm592, %v581, %v591
        %vm594 = vcmp.eq.f32.partialorder %v581, 0.0
        %v595 = vand.u32 %v581, 2147483648
        %v596 = vsel %vm594, %v595, %v593
        %v597 = vrsqrt.pop %v584
        %v598 = vmul.f32 %v597, %v584
        %v599 = vmul.f32 %v598, %v597
        %v600 = vmul.f32 0.5, %v599
        %v601 = vsub.f32 1.5, %v600
        %v602 = vmul.f32 %v597, %v601
        %v603 = vmul.f32 %v584, %v602
        %vm604 = vcmp.eq.f32.partialorder %v584, inf
        %v605 = vsel %vm604, %v584, %v603
        %vm606 = vcmp.eq.f32.partialorder %v584, 0.0
        %v607 = vand.u32 %v584, 2147483648
        %v608 = vsel %vm606, %v607, %v605
        %v609 = vadd.f32 %v429, %v596
        %v610 = vadd.f32 %v430, %v608
        %v611 = vmul.f32 %v609, 0.5
        %v612 = vmul.f32 %v610, 0.5
        %615 = vrot.lane.b32.xlu0 %v611, 1
        %v616 = vpop.permute.xlu0 %615
        %617 = vrot.lane.b32.xlu0 %v612, 1
        %v618 = vpop.permute.xlu0 %617
        %v621 = vadd.f32 %v557, %v616
        %v622 = vadd.f32 %v558, %v618
        %623 = vrot.lane.b32.xlu0 %v259, 2
        %v624 = vpop.permute.xlu0 %623
        %625 = vrot.lane.b32.xlu0 %v261, 2
        %v626 = vpop.permute.xlu0 %625
        %v629 = vmul.f32 %v240, %v624
        %v630 = vmul.f32 %v255, %v626
        %v631 = vsub.f32 %v268, %v629
        %v632 = vsub.f32 %v269, %v630
        %633 = vrot.lane.b32.xlu0 %v272, 64
        %v634 = vpop.permute.xlu0 %633
        %635 = vrot.lane.b32.xlu0 %v276, 64
        %v636 = vpop.permute.xlu0 %635
        %v639 = vsub.f32 %v271, %v634
        %v640 = vsub.f32 %v275, %v636
        %v641 = vmul.f32 %v639, %v639
        %v642 = vmul.f32 %v640, %v640
        %645 = vrot.lane.b32.xlu0 %v641, 64
        %v646 = vpop.permute.xlu0 %645
        %647 = vrot.lane.b32.xlu0 %v642, 64
        %v648 = vpop.permute.xlu0 %647
        %v651 = vsel %vm310, %v646, 0.0
        %652 = vadd.xlane.f32.xlu0 %v651
        %v653 = vpop.xlane.xlu0 %652
        %v654 = vsel %vm310, %v648, 0.0
        %655 = vadd.xlane.f32.xlu0 %v654
        %v656 = vpop.xlane.xlu0 %655
        %v657 = vrsqrt.pop %v653
        %v658 = vmul.f32 %v657, %v653
        %v659 = vmul.f32 %v658, %v657
        %v660 = vmul.f32 0.5, %v659
        %v661 = vsub.f32 1.5, %v660
        %v662 = vmul.f32 %v657, %v661
        %v663 = vmul.f32 %v653, %v662
        %vm664 = vcmp.eq.f32.partialorder %v653, inf
        %v665 = vsel %vm664, %v653, %v663
        %vm666 = vcmp.eq.f32.partialorder %v653, 0.0
        %v667 = vand.u32 %v653, 2147483648
        %v668 = vsel %vm666, %v667, %v665
        %v669 = vrsqrt.pop %v656
        %v670 = vmul.f32 %v669, %v656
        %v671 = vmul.f32 %v670, %v669
        %v672 = vmul.f32 0.5, %v671
        %v673 = vsub.f32 1.5, %v672
        %v674 = vmul.f32 %v669, %v673
        %v675 = vmul.f32 %v656, %v674
        %vm676 = vcmp.eq.f32.partialorder %v656, inf
        %v677 = vsel %vm676, %v656, %v675
        %vm678 = vcmp.eq.f32.partialorder %v656, 0.0
        %v679 = vand.u32 %v656, 2147483648
        %v680 = vsel %vm678, %v679, %v677
        %v681 = vadd.f32 %v631, %v668
        %v682 = vadd.f32 %v632, %v680
        %v683 = vmul.f32 %v681, 0.8
        %v684 = vmul.f32 %v682, 0.8
        %687 = vrot.lane.b32.xlu0 %v683, 4
        %v688 = vpop.permute.xlu0 %687
        %689 = vrot.lane.b32.xlu0 %v684, 4
        %v690 = vpop.permute.xlu0 %689
        %v693 = vadd.f32 %v621, %v688
        %v694 = vadd.f32 %v622, %v690
        %s695 = sadd.s32 %s23, %s24
        %s696 = smul.u32 %s695, 16
        %v697 = vlaneseq
        %v698 = vshrl.u32 %v697, 7
        %v699 = vadd.s32 %v698, 8
        %v700 = vstv %s696
        %v701 = vadd.s32 %v700, %v698
        %v702 = vadd.s32 %v700, %v699
        %vm703 = vcmp.lt.s32.totalorder %v701, 2
        %vm704 = vcmp.lt.s32.totalorder %v702, 2
        %v705 = vsel %vm703, %v693, 0.0
        %v706 = vsel %vm704, %v694, 0.0
        %v707 = vld [vmem:[%s200] sm:$0xff]
        %710 = vrot.lane.b32.xlu0 %v705, 116
        %v711 = vpop.permute.xlu0 %710
        %712 = vrot.lane.b32.xlu0 %v706, 116
        %v713 = vpop.permute.xlu0 %712
        %vm716 = vcmask 7168
        %v717 = vsel %vm716, %v711, 0.0
        %v718 = vsel %vm716, %v713, 0.0
        %v719 = vadd.f32 %v717, %v718
        %720 = vadd.xlane.f32.xlu0 %v719
        %v721 = vpop.xlane.xlu0 %720
        %v722 = vrot.slane %v721, 4
        %v723 = vadd.f32 %v721, %v722
        %v724 = vrot.slane %v723, 2
        %v725 = vadd.f32 %v723, %v724
        %v726 = vrot.slane %v725, 1
        %v727 = vadd.f32 %v725, %v726
        %s728 = vtos %v727
        %v729 = vstv %s728
        %v730 = vadd.f32 %v707, %v729
        %731 = vst [vmem:[%s200] sm:$0xff] %v730
        %s732 = sand.u32 %s95, 1
        %s733 = scalar_lea.sflag [#allocation4], %s732
        %s734 = sand.u32 %s95, 1
        %s735 = smul.addr %s734, 8
        %s736 = scalar_lea.vmem [#allocation5], %s735
        // Predicated region
        $region37: #{tpu_custom_call.1} parent=27 // pred_check
          %p737 = pneg %p105
        $region38: #{tpu_custom_call.1} parent=27 // pred_check_branch
          %739 = sbr.rel (%p737) target = $region40
        $region39: #{tpu_custom_call.1} parent=27 // pred_region
          %741 = vsyncadd %s733, 0
          %s742 = smul.addr %s23, 8
          %s743 = scalar_lea.hbm %s2, %s742
          %s745 = sshll.u32 %s736, 4
          %s746 = int_to_ptr.vmem [resolvable:$true] %s745
          %s747 = sshll.u32 %s743, 4
          %s748 = int_to_ptr.hbm [resolvable:$true] %s747
          %750 = dma.vmem_to_hbm [thread:$0]  %s746, 128, %s748, %s733
        $region40: #{tpu_custom_call.1} parent=27 // pred_fallthru
          _
      $region28: #{tpu_custom_call.1} parent=5 // pred_fallthru
        _
      %p751 = scmp.le.s32.totalorder 2, %s14
      // Predicated region
      $region41: #{tpu_custom_call.1} parent=5 // pred_check
        %p752 = pneg %p751
      $region42: #{tpu_custom_call.1} parent=5 // pred_check_branch
        %754 = sbr.rel (%p752) target = $region44
      $region43: #{tpu_custom_call.1} parent=5 // pred_region
        %s755 = ssub.s32 %s14, 2
        // Predicated region
        $region45: #{tpu_custom_call.1} parent=43 // pred_check
          %p756 = pneg %p111
        $region46: #{tpu_custom_call.1} parent=43 // pred_check_branch
          %758 = sbr.rel (%p756) target = $region48
        $region47: #{tpu_custom_call.1} parent=43 // pred_region
          %s759 = sand.u32 %s96, 1
          %s760 = scalar_lea.sflag [#allocation4], %s759
          %s761 = sand.u32 %s96, 1
          %s762 = smul.addr %s761, 8
          %s763 = scalar_lea.vmem [#allocation5], %s762
          %765 = dma.done %s760, 128
        $region48: #{tpu_custom_call.1} parent=43 // pred_fallthru
          _
      $region44: #{tpu_custom_call.1} parent=5 // pred_fallthru
        _
    $region6: #{tpu_custom_call.1} parent=1 // loop_footer
      %s18 = sadd.s32 1, %s14
    $region7: #{tpu_custom_call.1} parent=1 // loop_footer_branch
      %13 = sbr.rel target = $region3
    $region8: #{tpu_custom_call.1} parent=1 // loop_exit
      _
    %766 = vsyncpa [#allocation3], 1
    %s767 = scalar_lea.sflag [#allocation3], 1
    %768 = vsyncpa %s767, 1
    %769 = vsyncpa [#allocation4], 1
    %s770 = scalar_lea.sflag [#allocation4], 1
    %771 = vsyncpa %s770, 1

</llo_original>
